<compile_context>
chip_gen: v7x
topology: tpu7x:2x2x1
jax: 0.10.0
libtpu: 0.0.40
codegen_flags: <defaults>
</compile_context>

<pallas_src>
import jax
import jax.numpy as jnp
from jax.experimental import pallas as pl
from jax.experimental.pallas import tpu as pltpu


def _tri_memb_kernel(params_ref, x_ref, o_ref):
    """Elementwise triangular membership.

    params_ref : SMEM (5,) float32 -> [a, b, c, b - a, c - b]
    x_ref      : VMEM tile of x (native input dtype, cast to f32 in-kernel)
    o_ref      : VMEM tile of output (native output dtype)
    """
    a = params_ref[0]
    b = params_ref[1]
    c = params_ref[2]
    ba = params_ref[3]   # b - a
    cb = params_ref[4]   # c - b

    x = x_ref[...].astype(jnp.float32)

    rising = (a < x) & (x <= b)
    falling = (b < x) & (x <= c)

    # True divides for parity with torch; degenerate params (a == b or b == c)
    # yield inf/nan in the unselected branch, discarded by the selects exactly
    # like torch's masked divide.
    up = (x - a) / ba
    down = (c - x) / cb

    mu = jnp.where(rising, up, jnp.where(falling, down, 0.0))
    o_ref[...] = mu.astype(o_ref.dtype)


def _default_block_bytes():
    """Per-generation block-size target (bigger on v7x's 3.2 TB/s HBM)."""
    try:
        kind = jax.devices()[0].device_kind.lower()
    except Exception:
        kind = ""
    if "v7" in kind:
        return 8 * 1024 * 1024
    return 4 * 1024 * 1024


def triangular_memb(x, a, b, c, *, target_block_bytes=None):
    """Apply the triangular membership function elementwise to x."""
    orig_shape = x.shape
    in_dtype = x.dtype
    # Output dtype matches input for floats (torch promotes ints to float32).
    out_dtype = in_dtype if jnp.issubdtype(in_dtype, jnp.floating) else jnp.float32

    n = x.size
    if n == 0:
        return jnp.zeros(orig_shape, out_dtype)

    a32 = jnp.asarray(a, jnp.float32)
    b32 = jnp.asarray(b, jnp.float32)
    c32 = jnp.asarray(c, jnp.float32)
    params = jnp.stack([a32, b32, c32, b32 - a32, c32 - b32]).astype(jnp.float32)

    def _jnp_tri(xi):
        # Tiny-tail / fallback path (pure jnp), identical math to the kernel.
        xf = xi.astype(jnp.float32)
        mu = jnp.where(
            (a32 < xf) & (xf <= b32),
            (xf - a32) / (b32 - a32),
            jnp.where((b32 < xf) & (xf <= c32), (c32 - xf) / (c32 - b32), 0.0),
        )
        return mu.astype(out_dtype)

    # ---- lane-dense 2-D packing -------------------------------------------
    # Prefer the widest power-of-two lane extent that divides n exactly
    # (zero-cost reshape, no tail); otherwise use 128 lanes and handle the
    # <128-element tail with plain jnp (no whole-array pad / slice passes).
    cols = 128
    for cand in (4096, 2048, 1024, 512, 256, 128):
        if n % cand == 0:
            cols = cand
            break

    n_main = (n // cols) * cols
    xflat = x.reshape(-1)

    if n_main == 0:
        # Fewer than `cols` elements total: not worth a kernel launch.
        return _jnp_tri(xflat).reshape(orig_shape)

    rows = n_main // cols
    x2d = xflat[:n_main].reshape(rows, cols)

    # ---- block sizing -------------------------------------------------------
    in_item = jnp.dtype(in_dtype).itemsize
    out_item = jnp.dtype(out_dtype).itemsize
    itemsize = max(in_item, out_item)
    # Sublane granularity for the most-packed dtype involved:
    # 8 rows for 32-bit, 16 for 16-bit, 32 for 8-bit -> unmasked, layout-clean tiles.
    sub = max(8, 32 // min(in_item, out_item))

    if target_block_bytes is None:
        target_block_bytes = _default_block_bytes()

    block_rows = max(sub, (target_block_bytes // (cols * itemsize)) // sub * sub)

    # Keep >= ~8 grid steps (for DMA/compute/writeback overlap and v7x 2-TC
    # sharding of the "parallel" axis) as long as blocks stay >= ~512 KiB.
    min_block_rows = max(sub, ((512 * 1024) // (cols * itemsize)) // sub * sub)
    max_steps = max(1, rows // min_block_rows)
    steps = min(8, max_steps)
    if steps >= 2:
        cap = -(-rows // steps)          # cdiv(rows, steps)
        cap = -(-cap // sub) * sub       # round up to sublane granularity
        block_rows = min(block_rows, max(cap, min_block_rows))

    if block_rows >= rows:
        block_rows = rows                # full-extent block is always legal
    grid = (pl.cdiv(rows, block_rows),)

    out2d = pl.pallas_call(
        _tri_memb_kernel,
        out_shape=jax.ShapeDtypeStruct((rows, cols), out_dtype),
        grid_spec=pltpu.PrefetchScalarGridSpec(
            num_scalar_prefetch=1,  # params land in SMEM
            grid=grid,
            in_specs=[pl.BlockSpec((block_rows, cols), lambda i, p: (i, 0))],
            out_specs=pl.BlockSpec((block_rows, cols), lambda i, p: (i, 0)),
        ),
        compiler_params=pltpu.CompilerParams(
            dimension_semantics=("parallel",),
            vmem_limit_bytes=48 * 1024 * 1024,
        ),
        cost_estimate=pl.CostEstimate(
            flops=10 * n_main,
            transcendentals=0,
            bytes_accessed=n_main * (in_item + out_item),
        ),
    )(params, x2d)

    out_main = out2d.reshape(-1)
    if n_main == n:
        return out_main.reshape(orig_shape)

    # Ragged tail (< cols elements): tiny jnp compute, concatenate only the tail.
    out_tail = _jnp_tri(xflat[n_main:])
    return jnp.concatenate([out_main, out_tail]).reshape(orig_shape)


def _reference(x, a, b, c):
    out_dtype = x.dtype if jnp.issubdtype(x.dtype, jnp.floating) else jnp.float32
    xf = x.astype(jnp.float32)
    ref = jnp.where(
        (a < xf) & (xf <= b),
        (xf - a) / (b - a),
        jnp.where((b < xf) & (xf <= c), (c - xf) / (c - b), jnp.zeros_like(xf)),
    )
    return ref.astype(out_dtype)


if __name__ == "__main__":
    # Deterministic parameters (module __init__ takes scalars a <= b <= c).
    a, b, c = -0.5, 0.25, 1.0

    key = jax.random.PRNGKey(0)
    x = jax.random.normal(key, (2, 4, 16, 16), dtype=jnp.float32)  # NCHW-like

    y = triangular_memb(x, a, b, c)
    jax.block_until_ready(y)

    ref = _reference(x, a, b, c)
    assert y.shape == x.shape and y.dtype == x.dtype
    assert jnp.max(jnp.abs(y - ref)) < 1e-6

    # Ragged (non-128-divisible) case: aligned prefix through the kernel,
    # <128-element tail via jnp, no whole-array pad/slice.
    x_odd = jax.random.normal(jax.random.PRNGKey(1), (3, 5, 70), dtype=jnp.float32)
    y_odd = triangular_memb(x_odd, a, b, c)
    jax.block_until_ready(y_odd)
    assert y_odd.shape == x_odd.shape and y_odd.dtype == x_odd.dtype
    assert jnp.max(jnp.abs(y_odd - _reference(x_odd, a, b, c))) < 1e-6

    # Integer input: native-dtype I/O into the kernel, float32 output
    # (torch promotes int / float-param arithmetic to float32).
    x_int = jax.random.randint(jax.random.PRNGKey(2), (4, 64), -2, 3, dtype=jnp.int32)
    y_int = triangular_memb(x_int, a, b, c)
    jax.block_until_ready(y_int)
    assert y_int.dtype == jnp.float32
    assert jnp.max(jnp.abs(y_int - _reference(x_int, a, b, c))) < 1e-6

    print("KERNEL_OK")
</pallas_src>

<mosaic_0001>
module attributes {stable_mosaic.version = 11 : i64} {
  func.func @_tri_memb_kernel(%arg0: i32, %arg1: memref<5xf32, #tpu.memory_space<smem>>, %arg2: memref<1x2048xf32, #tpu.memory_space<vmem>>, %arg3: memref<1x2048xf32, #tpu.memory_space<vmem>>) attributes {dimension_semantics = [#tpu.dimension_semantics<parallel>], iteration_bounds = array<i64: 1>, scalar_prefetch = 1 : i64, scratch_operands = 0 : i64, tpu.core_type = #tpu.core_type<tc>, window_params = [{transform_indices = @transform_0, window_bounds = array<i64: 1, 2048>}, {transform_indices = @transform_1, window_bounds = array<i64: 1, 2048>}]} {
    %c0 = arith.constant 0 : index
    %0 = memref.load %arg1[%c0] : memref<5xf32, #tpu.memory_space<smem>>
    %c1 = arith.constant 1 : index
    %1 = memref.load %arg1[%c1] : memref<5xf32, #tpu.memory_space<smem>>
    %c2 = arith.constant 2 : index
    %2 = memref.load %arg1[%c2] : memref<5xf32, #tpu.memory_space<smem>>
    %c3 = arith.constant 3 : index
    %3 = memref.load %arg1[%c3] : memref<5xf32, #tpu.memory_space<smem>>
    %c4 = arith.constant 4 : index
    %4 = memref.load %arg1[%c4] : memref<5xf32, #tpu.memory_space<smem>>
    %c0_0 = arith.constant 0 : index
    %c0_1 = arith.constant 0 : index
    %5 = vector.load %arg2[%c0_0, %c0_1] : memref<1x2048xf32, #tpu.memory_space<vmem>>, vector<1x2048xf32>
    %6 = vector.broadcast %0 : f32 to vector<1x2048xf32>
    %7 = arith.cmpf olt, %6, %5 : vector<1x2048xf32>
    %8 = vector.broadcast %1 : f32 to vector<1x2048xf32>
    %9 = arith.cmpf ole, %5, %8 : vector<1x2048xf32>
    %10 = arith.andi %7, %9 : vector<1x2048xi1>
    %11 = vector.broadcast %1 : f32 to vector<1x2048xf32>
    %12 = arith.cmpf olt, %11, %5 : vector<1x2048xf32>
    %13 = vector.broadcast %2 : f32 to vector<1x2048xf32>
    %14 = arith.cmpf ole, %5, %13 : vector<1x2048xf32>
    %15 = arith.andi %12, %14 : vector<1x2048xi1>
    %16 = vector.broadcast %0 : f32 to vector<1x2048xf32>
    %17 = arith.subf %5, %16 : vector<1x2048xf32>
    %18 = vector.broadcast %3 : f32 to vector<1x2048xf32>
    %19 = arith.divf %17, %18 : vector<1x2048xf32>
    %20 = vector.broadcast %2 : f32 to vector<1x2048xf32>
    %21 = arith.subf %20, %5 : vector<1x2048xf32>
    %22 = vector.broadcast %4 : f32 to vector<1x2048xf32>
    %23 = arith.divf %21, %22 : vector<1x2048xf32>
    %cst = arith.constant 0.000000e+00 : f32
    %24 = vector.broadcast %cst : f32 to vector<1x2048xf32>
    %25 = arith.select %15, %23, %24 : vector<1x2048xi1>, vector<1x2048xf32>
    %26 = arith.select %10, %19, %25 : vector<1x2048xi1>, vector<1x2048xf32>
    %c0_2 = arith.constant 0 : index
    %c0_3 = arith.constant 0 : index
    %27 = vector.load %arg3[%c0_2, %c0_3] : memref<1x2048xf32, #tpu.memory_space<vmem>>, vector<1x2048xf32>
    tpu.vector_store %arg3[%c0_2, %c0_3], %26 {strides = array<i32>} : memref<1x2048xf32, #tpu.memory_space<vmem>>, vector<1x2048xf32>,
    return
  }
  func.func @transform_0(%arg0: i32, %arg1: memref<5xf32, #tpu.memory_space<smem>>) -> (i32, i32) {
    %c0_i32 = arith.constant 0 : i32
    %c0_i32_0 = arith.constant 0 : i32
    return %arg0, %c0_i32 : i32, i32
  }
  func.func @transform_1(%arg0: i32, %arg1: memref<5xf32, #tpu.memory_space<smem>>) -> (i32, i32) {
    %c0_i32 = arith.constant 0 : i32
    %c0_i32_0 = arith.constant 0 : i32
    return %arg0, %c0_i32 : i32, i32
  }
}

</mosaic_0001>

<llo_original>
// kernel: tpu_custom_call.1
$region0: #{tpu_custom_call.1}
  #allocation0 [shape = 'u32[]', space=smem, size = 0x4, offset = 0x4, fixed_abs, tag = 'smem constant byte address 0x4 - core index']
  #allocation1 [shape = 'u32[144,128]{1,0:T(1,128)}', space=vmem, size = 0x12000, scoped, tag = 'internal scratch']
  #allocation2 [shape = 's32[1]{0}', space=sflag, size = 0x4, scoped, tag = 'scoped memory for tpu_custom_call.1']
  #allocation3 [shape = 'u8[512]{0}', space=smem, size = 0x200, scoped, tag = 'prefetched SMEM operand 0']
  %s0 = inlined_call_operand.hbm [shape: f32[5], index: 0, kind: input, shape index: {}]
  %s1 = inlined_call_operand.hbm [shape: f32[1,2048], index: 1, kind: input, shape index: {}]
  %s2 = inlined_call_operand.hbm [shape: f32[1,2048], index: 2, kind: output, shape index: {}]
  %s3 = sld [smem:[#allocation0]]
  $region18: #{tpu_custom_call.1} parent=0
    _
  %s5 = ssub.s32 1, %s3
  %s6 = scalar_select 0, %s5, %s3
  %8 = dma.hbm_to_smem %s0, 16, [#allocation3], [#allocation2]
  %9 = dma.done [#allocation2], 16
  %10 = sfence
  $region1: #{tpu_custom_call.1} parent=0
    #allocation4 [shape = 'u8[8192]{0}', space=vmem, size = 0x2000, scoped, tag = 'input window, operand 1, single buffered']
    #allocation5 [shape = 's32[1]{0}', space=sflag, size = 0x4, scoped, tag = 'scoped memory for tpu_custom_call.1']
    #allocation6 [shape = 's32[1]{0}', space=sflag, size = 0x4, scoped, tag = 'scoped memory for tpu_custom_call.1']
    #allocation7 [shape = 'u8[8192]{0}', space=vmem, size = 0x2000, scoped, tag = 'output window, operand 0, single buffered']
    %11 = vsyncpa [#allocation5], 0
    %12 = vsyncpa [#allocation6], 0
    // Predicated region
    $region2: #{tpu_custom_call.1} parent=1 // pred_check
      _
    $region3: #{tpu_custom_call.1} parent=1 // pred_check_branch
      %14 = sbr.rel (0) target = $region5
    $region4: #{tpu_custom_call.1} parent=1 // pred_region
      %s16 = ssub.s32 256, 256
      %17 = vsyncadd [#allocation5], %s16
      %s19 = sshll.u32 [#allocation4], 4
      %s20 = int_to_ptr.vmem [resolvable:$true] %s19
      %22 = dma.hbm_to_vmem [thread:$0]  %s1, 256, %s20, [#allocation5]
    $region5: #{tpu_custom_call.1} parent=1 // pred_fallthru
      _
    // Predicated region
    $region6: #{tpu_custom_call.1} parent=1 // pred_check
      _
    $region7: #{tpu_custom_call.1} parent=1 // pred_check_branch
      %24 = sbr.rel (0) target = $region9
    $region8: #{tpu_custom_call.1} parent=1 // pred_region
      %25 = dma.done [#allocation5], 256
    $region9: #{tpu_custom_call.1} parent=1 // pred_fallthru
      _
    %s26 = sld [smem:[#allocation3]]
    %s27 = sld [smem:[#allocation3 + $0x1]]
    %s28 = sld [smem:[#allocation3 + $0x2]]
    %s29 = sld [smem:[#allocation3 + $0x3]]
    %s30 = sld [smem:[#allocation3 + $0x4]]
    %v31 = vld [vmem:[#allocation4] sm:$0xff]
    %v32 = vld [vmem:[#allocation4 + $0x8] sm:$0xff]
    %v33 = vstv %s26
    %vm34 = vcmp.lt.f32.partialorder %v33, %v31
    %vm35 = vcmp.lt.f32.partialorder %v33, %v32
    %v36 = vstv %s27
    %vm37 = vcmp.le.f32.partialorder %v31, %v36
    %vm38 = vcmp.le.f32.partialorder %v32, %v36
    %vm39 = vmand %vm34, %vm37
    %vm40 = vmand %vm35, %vm38
    %vm41 = vcmp.lt.f32.partialorder %v36, %v31
    %vm42 = vcmp.lt.f32.partialorder %v36, %v32
    %v43 = vstv %s28
    %vm44 = vcmp.le.f32.partialorder %v31, %v43
    %vm45 = vcmp.le.f32.partialorder %v32, %v43
    %vm46 = vmand %vm41, %vm44
    %vm47 = vmand %vm42, %vm45
    %v48 = vsub.f32 %v31, %v33
    %v49 = vsub.f32 %v32, %v33
    %v50 = vstv %s29
    %v51 = vrcp.pop %v50
    %v52 = vmul.f32 %v48, %v51
    %v53 = vmul.f32 %v49, %v51
    %v54 = vsub.f32 %v43, %v31
    %v55 = vsub.f32 %v43, %v32
    %v56 = vstv %s30
    %v57 = vrcp.pop %v56
    %v58 = vmul.f32 %v54, %v57
    %v59 = vmul.f32 %v55, %v57
    %v60 = vsel %vm46, %v58, 0.0
    %v61 = vsel %vm47, %v59, 0.0
    %v62 = vsel %vm39, %v52, %v60
    %v63 = vsel %vm40, %v53, %v61
    %64 = vst [vmem:[#allocation7] sm:$0xff] %v62
    %65 = vst [vmem:[#allocation7 + $0x8] sm:$0xff] %v63
    // Predicated region
    $region10: #{tpu_custom_call.1} parent=1 // pred_check
      _
    $region11: #{tpu_custom_call.1} parent=1 // pred_check_branch
      %67 = sbr.rel (0) target = $region13
    $region12: #{tpu_custom_call.1} parent=1 // pred_region
      %s69 = ssub.s32 256, 256
      %70 = vsyncadd [#allocation6], %s69
      %s72 = sshll.u32 [#allocation7], 4
      %s73 = int_to_ptr.vmem [resolvable:$true] %s72
      %75 = dma.vmem_to_hbm [thread:$0]  %s73, 256, %s2, [#allocation6]
    $region13: #{tpu_custom_call.1} parent=1 // pred_fallthru
      _
    // Predicated region
    $region14: #{tpu_custom_call.1} parent=1 // pred_check
      _
    $region15: #{tpu_custom_call.1} parent=1 // pred_check_branch
      %77 = sbr.rel (0) target = $region17
    $region16: #{tpu_custom_call.1} parent=1 // pred_region
      %78 = dma.done [#allocation6], 256
    $region17: #{tpu_custom_call.1} parent=1 // pred_fallthru
      _
    %79 = vsyncpa [#allocation5], 1
    %80 = vsyncpa [#allocation6], 1

</llo_original>
